<compile_context>
chip_gen: v5e
topology: v5e:2x2
jax: 0.10.0
libtpu: 0.0.40
codegen_flags: <defaults>
</compile_context>

<pallas_src>
import functools

import jax
import jax.numpy as jnp
from jax.experimental import pallas as pl
from jax.experimental.pallas import tpu as pltpu


def _avg_pool_kernel(last_chunk_ref, actual_ref, x_ref, o_ref, acc_ref, *, tt):
    # last_chunk_ref : SMEM (num_batch_blocks,) i32  last needed time chunk per block
    # actual_ref     : VMEM (TB, 1) i32              per-row valid lengths
    # x_ref          : VMEM (TB, TT, D)              current (batch block, time chunk)
    # o_ref          : VMEM (TB, D)                  pooled output (resident across j)
    # acc_ref        : VMEM (TB, D) f32              running masked sum
    i = pl.program_id(0)
    j = pl.program_id(1)
    lc = last_chunk_ref[i]

    @pl.when(j == 0)
    def _init():
        acc_ref[...] = jnp.zeros_like(acc_ref)

    @pl.when(j <= lc)
    def _accumulate():
        actual = actual_ref[...]                                      # (TB, 1) i32
        # Mask built directly in the (TB, TT, D) layout: lane-constant iota,
        # no (TB, TT) -> (TB, TT, D) cross-lane broadcast.
        t_idx = jax.lax.broadcasted_iota(jnp.int32, x_ref.shape, 1) + j * tt
        mask = t_idx < actual[:, :, None]                             # (TB, TT, D)
        xm = jnp.where(mask, x_ref[...], 0).astype(jnp.float32)
        acc_ref[...] += jnp.sum(xm, axis=1)                           # (TB, D)

    @pl.when(j == lc)
    def _finalize():
        inv = 1.0 / actual_ref[...].astype(jnp.float32)               # (TB, 1)
        o_ref[...] = (acc_ref[...] * inv).astype(o_ref.dtype)


def avg_pooling(x, lens, *, tb=8, target_block_bytes=8 << 20,
                vmem_limit_bytes=32 << 20):
    """x: (B, T, D), lens: (B,) relative lengths in [0, 1]. Returns (B, D)."""
    B, T, D = x.shape
    itemsize = jnp.dtype(x.dtype).itemsize

    # ---- batch block: TB rows per grid step (sublane-dense output block) ----
    TB = tb if B >= tb else B
    B_pad = pl.cdiv(B, TB) * TB
    num_bb = B_pad // TB

    # ---- time chunk: dtype-packed multiple keeping a block near the target ---
    sub = 8 * max(1, 4 // itemsize)            # 8 f32, 16 bf16, 32 int8/fp8
    tt = max(1, target_block_bytes // max(TB * D * itemsize, 1))
    if tt >= T:
        TT, T_pad = T, T                       # single block spans full time dim
    else:
        TT = max(sub, (tt // sub) * sub)
        T_pad = pl.cdiv(T, TT) * TT
    num_tb = T_pad // TT

    # ---- integer valid lengths, computed once (torch-style f32 floor) --------
    actual = jnp.floor(lens.astype(jnp.float32) * T).astype(jnp.int32)
    # Rows with floor(lens*T) == 0 would be a mean over zero frames (NaN in
    # torch); clamp to 1 so the kernel stays finite.  Documented deviation.
    actual = jnp.clip(actual, 1, T)
    if B_pad != B:
        actual = jnp.pad(actual, (0, B_pad - B), constant_values=1)
    # Last time chunk each batch block actually needs (drives the DMA skip).
    last_chunk = ((jnp.max(actual.reshape(num_bb, TB), axis=1) - 1) // TT
                  ).astype(jnp.int32)
    actual2d = actual.reshape(B_pad, 1)

    if B_pad != B or T_pad != T:
        x = jnp.pad(x, ((0, B_pad - B), (0, T_pad - T), (0, 0)))

    out = pl.pallas_call(
        functools.partial(_avg_pool_kernel, tt=TT),
        out_shape=jax.ShapeDtypeStruct((B_pad, D), x.dtype),
        grid_spec=pltpu.PrefetchScalarGridSpec(
            num_scalar_prefetch=1,
            grid=(num_bb, num_tb),
            in_specs=[
                pl.BlockSpec((TB, 1), lambda i, j, lc: (i, 0)),       # lengths
                # Clamp the time-block index so fully-masked chunks revisit the
                # previous block and their HBM DMA is elided.
                pl.BlockSpec((TB, TT, D),
                             lambda i, j, lc: (i, jnp.minimum(j, lc[i]), 0)),
            ],
            out_specs=pl.BlockSpec((TB, D), lambda i, j, lc: (i, 0)),
            scratch_shapes=[pltpu.VMEM((TB, D), jnp.float32)],
        ),
        compiler_params=pltpu.CompilerParams(
            dimension_semantics=("parallel", "arbitrary"),
            vmem_limit_bytes=vmem_limit_bytes),
    )(last_chunk, actual2d, x)

    return out[:B] if B_pad != B else out


def _reference(x, lens):
    # Pure-JAX reference mirroring the PyTorch loop.
    B, T, D = x.shape
    outs = []
    for i in range(B):
        actual = int(jnp.floor(lens[i] * T))
        outs.append(jnp.mean(x[i, :actual], axis=-2))
    return jnp.stack(outs)


if __name__ == "__main__":
    key = jax.random.PRNGKey(0)
    kx, kl, kx2, kl2 = jax.random.split(key, 4)

    # --- test 1: module-sized small shapes (single block) -------------------
    B, T, D = 2, 16, 32
    x = jax.random.normal(kx, (B, T, D), dtype=jnp.float32)
    lens = jax.random.uniform(kl, (B,), dtype=jnp.float32,
                              minval=0.25, maxval=1.0)
    out = avg_pooling(x, lens)
    jax.block_until_ready(out)
    ref = _reference(x, lens)
    assert out.shape == (B, D)
    assert jnp.allclose(out, ref, atol=1e-5, rtol=1e-5), (
        f"max err {jnp.max(jnp.abs(out - ref))}")

    # --- test 2: exercises batch padding + chunked T + DMA-skip path --------
    B2, T2, D2 = 9, 40, 32
    x2 = jax.random.normal(kx2, (B2, T2, D2), dtype=jnp.float32)
    lens2 = jax.random.uniform(kl2, (B2,), dtype=jnp.float32,
                               minval=0.25, maxval=1.0)
    out2 = avg_pooling(x2, lens2, target_block_bytes=2048)  # force T chunking
    jax.block_until_ready(out2)
    ref2 = _reference(x2, lens2)
    assert out2.shape == (B2, D2)
    assert jnp.allclose(out2, ref2, atol=1e-5, rtol=1e-5), (
        f"max err {jnp.max(jnp.abs(out2 - ref2))}")

    print("KERNEL_OK")
</pallas_src>

<mosaic_0001>
module attributes {stable_mosaic.version = 11 : i64} {
  func.func @_avg_pool_kernel(%arg0: i32, %arg1: i32, %arg2: memref<1xi32, #tpu.memory_space<smem>>, %arg3: memref<2x1xi32, #tpu.memory_space<vmem>>, %arg4: memref<2x16x32xf32, #tpu.memory_space<vmem>>, %arg5: memref<2x32xf32, #tpu.memory_space<vmem>>, %arg6: memref<2x32xf32, #tpu.memory_space<vmem>>) attributes {dimension_semantics = [#tpu.dimension_semantics<parallel>, #tpu.dimension_semantics<arbitrary>], iteration_bounds = array<i64: 1, 1>, scalar_prefetch = 1 : i64, scratch_operands = 1 : i64, tpu.core_type = #tpu.core_type<tc>, window_params = [{transform_indices = @transform_0, window_bounds = array<i64: 2, 1>}, {transform_indices = @transform_1, window_bounds = array<i64: 2, 16, 32>}, {transform_indices = @transform_2, window_bounds = array<i64: 2, 32>}]} {
    %0 = arith.index_cast %arg0 : i32 to index
    %1 = memref.load %arg2[%0] : memref<1xi32, #tpu.memory_space<smem>>
    %c0_i32 = arith.constant 0 : i32
    %2 = arith.cmpi eq, %arg1, %c0_i32 : i32
    %3 = arith.extui %2 : i1 to i32
    %c0_i32_0 = arith.constant 0 : i32
    %4 = arith.cmpi ne, %3, %c0_i32_0 : i32
    scf.if %4 {
      %cst = arith.constant 0.000000e+00 : f32
      %11 = vector.broadcast %cst : f32 to vector<2x32xf32>
      %c0 = arith.constant 0 : index
      %c0_3 = arith.constant 0 : index
      %12 = vector.load %arg6[%c0, %c0_3] : memref<2x32xf32, #tpu.memory_space<vmem>>, vector<2x32xf32>
      tpu.vector_store %arg6[%c0, %c0_3], %11 {strides = array<i32>} : memref<2x32xf32, #tpu.memory_space<vmem>>, vector<2x32xf32>,
    } else {
    }
    %5 = arith.cmpi sle, %arg1, %1 : i32
    %6 = arith.extui %5 : i1 to i32
    %c0_i32_1 = arith.constant 0 : i32
    %7 = arith.cmpi ne, %6, %c0_i32_1 : i32
    scf.if %7 {
      %c0 = arith.constant 0 : index
      %c0_3 = arith.constant 0 : index
      %11 = vector.load %arg3[%c0, %c0_3] : memref<2x1xi32, #tpu.memory_space<vmem>>, vector<2x1xi32>
      %12 = tpu.iota {dimensions = array<i32: 1>} : vector<2x16x32xi32>
      %c16_i32 = arith.constant 16 : i32
      %13 = arith.muli %arg1, %c16_i32 : i32
      %14 = vector.broadcast %13 : i32 to vector<2x16x32xi32>
      %15 = arith.addi %12, %14 : vector<2x16x32xi32>
      %16 = vector.shape_cast %11 : vector<2x1xi32> to vector<2x1x1xi32>
      %17 = vector.broadcast %16 : vector<2x1x1xi32> to vector<2x16x32xi32>
      %18 = arith.cmpi slt, %15, %17 : vector<2x16x32xi32>
      %c0_4 = arith.constant 0 : index
      %c0_5 = arith.constant 0 : index
      %c0_6 = arith.constant 0 : index
      %19 = vector.load %arg4[%c0_4, %c0_5, %c0_6] : memref<2x16x32xf32, #tpu.memory_space<vmem>>, vector<2x16x32xf32>
      %c0_i32_7 = arith.constant 0 : i32
      %20 = arith.sitofp %c0_i32_7 : i32 to f32
      %21 = vector.broadcast %20 : f32 to vector<2x16x32xf32>
      %22 = arith.select %18, %19, %21 : vector<2x16x32xi1>, vector<2x16x32xf32>
      %c0_8 = arith.constant 0 : index
      %c0_9 = arith.constant 0 : index
      %23 = vector.load %arg6[%c0_8, %c0_9] : memref<2x32xf32, #tpu.memory_space<vmem>>, vector<2x32xf32>
      %cst = arith.constant dense<0.000000e+00> : vector<2x32xf32>
      %24 = vector.multi_reduction <add>, %22, %cst [1] : vector<2x16x32xf32> to vector<2x32xf32>
      %25 = arith.addf %23, %24 : vector<2x32xf32>
      %c0_10 = arith.constant 0 : index
      %c0_11 = arith.constant 0 : index
      %26 = vector.load %arg6[%c0_10, %c0_11] : memref<2x32xf32, #tpu.memory_space<vmem>>, vector<2x32xf32>
      tpu.vector_store %arg6[%c0_10, %c0_11], %25 {strides = array<i32>} : memref<2x32xf32, #tpu.memory_space<vmem>>, vector<2x32xf32>,
    } else {
    }
    %8 = arith.cmpi eq, %arg1, %1 : i32
    %9 = arith.extui %8 : i1 to i32
    %c0_i32_2 = arith.constant 0 : i32
    %10 = arith.cmpi ne, %9, %c0_i32_2 : i32
    scf.if %10 {
      %c0 = arith.constant 0 : index
      %c0_3 = arith.constant 0 : index
      %11 = vector.load %arg3[%c0, %c0_3] : memref<2x1xi32, #tpu.memory_space<vmem>>, vector<2x1xi32>
      %12 = arith.sitofp %11 : vector<2x1xi32> to vector<2x1xf32>
      %cst = arith.constant 1.000000e+00 : f32
      %13 = vector.broadcast %cst : f32 to vector<2x1xf32>
      %14 = arith.divf %13, %12 : vector<2x1xf32>
      %c0_4 = arith.constant 0 : index
      %c0_5 = arith.constant 0 : index
      %15 = vector.load %arg6[%c0_4, %c0_5] : memref<2x32xf32, #tpu.memory_space<vmem>>, vector<2x32xf32>
      %16 = vector.broadcast %14 : vector<2x1xf32> to vector<2x32xf32>
      %17 = arith.mulf %15, %16 : vector<2x32xf32>
      %c0_6 = arith.constant 0 : index
      %c0_7 = arith.constant 0 : index
      %18 = vector.load %arg5[%c0_6, %c0_7] : memref<2x32xf32, #tpu.memory_space<vmem>>, vector<2x32xf32>
      tpu.vector_store %arg5[%c0_6, %c0_7], %17 {strides = array<i32>} : memref<2x32xf32, #tpu.memory_space<vmem>>, vector<2x32xf32>,
    } else {
    }
    return
  }
  func.func @transform_0(%arg0: i32, %arg1: i32, %arg2: memref<1xi32, #tpu.memory_space<smem>>) -> (i32, i32) {
    %c0_i32 = arith.constant 0 : i32
    %c0_i32_0 = arith.constant 0 : i32
    return %arg0, %c0_i32 : i32, i32
  }
  func.func @transform_1(%arg0: i32, %arg1: i32, %arg2: memref<1xi32, #tpu.memory_space<smem>>) -> (i32, i32, i32) {
    %0 = arith.index_cast %arg0 : i32 to index
    %1 = memref.load %arg2[%0] : memref<1xi32, #tpu.memory_space<smem>>
    %2 = arith.minsi %arg1, %1 : i32
    %c0_i32 = arith.constant 0 : i32
    %c0_i32_0 = arith.constant 0 : i32
    return %arg0, %2, %c0_i32 : i32, i32, i32
  }
  func.func @transform_2(%arg0: i32, %arg1: i32, %arg2: memref<1xi32, #tpu.memory_space<smem>>) -> (i32, i32) {
    %c0_i32 = arith.constant 0 : i32
    %c0_i32_0 = arith.constant 0 : i32
    return %arg0, %c0_i32 : i32, i32
  }
}

</mosaic_0001>

<llo_original>
// kernel: tpu_custom_call.1
$region0: #{tpu_custom_call.1}
  #allocation0 [shape = 'u32[]', space=smem, size = 0x4, offset = 0x4, fixed_abs, tag = 'smem constant byte address 0x4 - core index']
  #allocation1 [shape = 'u32[72,128]{1,0:T(1,128)}', space=vmem, size = 0x9000, scoped, tag = 'internal scratch']
  #allocation2 [shape = 'f32[2,32]{1,0:T(2,128)}', space=vmem, size = 0x400, scoped, tag = 'scratch operand']
  #allocation3 [shape = 's32[1]{0}', space=sflag, size = 0x4, scoped, tag = 'scoped memory for tpu_custom_call.1']
  #allocation4 [shape = 's32[1]{0:T(128)S(6)}', space=smem, size = 0x200, scoped, tag = 'prefetched SMEM operand 0']
  %s0 = inlined_call_operand.<no memory space> [shape: s32[1], index: 0, kind: input, shape index: {}]
  %s1 = inlined_call_operand.vmem [shape: s32[2,1], index: 1, kind: input, shape index: {}]
  %s2 = inlined_call_operand.hbm [shape: f32[2,16,32], index: 2, kind: input, shape index: {}]
  %s3 = inlined_call_operand.hbm [shape: f32[2,32], index: 3, kind: output, shape index: {}]
  %s4 = sld [smem:[#allocation0]]
  $region34: #{tpu_custom_call.1} parent=0
    _
  %s6 = ssub.s32 1, %s4
  %s7 = scalar_select 0, %s6, %s4
  %8 = sst [smem:[#allocation4]] %s0
  $region1: #{tpu_custom_call.1} parent=0
    #allocation5 [shape = 'u8[16384]{0}', space=vmem, size = 0x4000, scoped, tag = 'input window, operand 2, single buffered']
    #allocation6 [shape = 's32[1]{0}', space=sflag, size = 0x4, scoped, tag = 'scoped memory for tpu_custom_call.1']
    #allocation7 [shape = 's32[1]{0}', space=sflag, size = 0x4, scoped, tag = 'scoped memory for tpu_custom_call.1']
    #allocation8 [shape = 'u8[1024]{0}', space=vmem, size = 0x400, scoped, tag = 'output window, operand 0, single buffered']
    %9 = vsyncpa [#allocation6], 0
    %10 = vsyncpa [#allocation7], 0
    // Predicated region
    $region2: #{tpu_custom_call.1} parent=1 // pred_check
      _
    $region3: #{tpu_custom_call.1} parent=1 // pred_check_branch
      %12 = sbr.rel (0) target = $region5
    $region4: #{tpu_custom_call.1} parent=1 // pred_region
      _
    $region5: #{tpu_custom_call.1} parent=1 // pred_fallthru
      _
    // Predicated region
    $region6: #{tpu_custom_call.1} parent=1 // pred_check
      _
    $region7: #{tpu_custom_call.1} parent=1 // pred_check_branch
      %14 = sbr.rel (0) target = $region9
    $region8: #{tpu_custom_call.1} parent=1 // pred_region
      %s15 = sld [smem:[#allocation4]]
      %p16 = scmp.lt.s32.totalorder 0, %s15
      %s17 = scalar_select %p16, 0, %s15
      %s18 = smul.u32 2, %s17
      %20 = vsyncadd [#allocation6], 0
      %s21 = smul.addr %s18, 8
      %s22 = scalar_lea.hbm %s2, %s21
      %s23 = sshll.u32 %s22, 4
      %s24 = int_to_ptr.hbm [resolvable:$true] %s23
      %s25 = sshll.u32 [#allocation5], 4
      %s26 = int_to_ptr.vmem [resolvable:$true] %s25
      %31 = dma.hbm_to_vmem [thread:$0]  %s24, 512, %s26, [#allocation6], 128, 128, 8
    $region9: #{tpu_custom_call.1} parent=1 // pred_fallthru
      _
    // Predicated region
    $region10: #{tpu_custom_call.1} parent=1 // pred_check
      _
    $region11: #{tpu_custom_call.1} parent=1 // pred_check_branch
      %33 = sbr.rel (0) target = $region13
    $region12: #{tpu_custom_call.1} parent=1 // pred_region
      %35 = dma.done [#allocation6], 512
    $region13: #{tpu_custom_call.1} parent=1 // pred_fallthru
      _
    %s36 = sld [smem:[#allocation4]]
    %p37 = scmp.lt.s32.totalorder 0, %s36
    %s38 = scalar_select %p37, 0, %s36
    %s39 = smul.u32 2, %s38
    %s40 = sld [smem:[#allocation4]]
    %p41 = scmp.eq.s32.totalorder 0, 0
    // Predicated region
    $region14: #{tpu_custom_call.1} parent=1 // pred_check
      %p42 = pneg %p41
    $region15: #{tpu_custom_call.1} parent=1 // pred_check_branch
      %44 = sbr.rel (%p42) target = $region17
    $region16: #{tpu_custom_call.1} parent=1 // pred_region
      %vm45 = vcmask 254976
      %46 = vst.msk [vmem:[#allocation2] sm:$0x3] %vm45, 0.0
    $region17: #{tpu_custom_call.1} parent=1 // pred_fallthru
      _
    %p47 = scmp.le.s32.totalorder 0, %s40
    // Predicated region
    $region18: #{tpu_custom_call.1} parent=1 // pred_check
      %p48 = pneg %p47
    $region19: #{tpu_custom_call.1} parent=1 // pred_check_branch
      %50 = sbr.rel (%p48) target = $region21
    $region20: #{tpu_custom_call.1} parent=1 // pred_region
      %v51 = vld [vmem:[%s1] sm:$0x3]
      %v52 = vlaneseq
      %v53 = vshrl.u32 %v52, 7
      %v54 = vadd.s32 %v53, 8
      %s55 = smul.u32 0, 16
      %v56 = vstv %s55
      %v57 = vadd.s32 %v53, %v56
      %v58 = vadd.s32 %v54, %v56
      %v59 = vrot.slane %v51, 1
      %v60 = vperm.slane %v51, 0
      %v61 = vperm.slane %v59, 0
      %62 = vset.pattern.permute.xlu0 0
      %63 = vperm.xlu0 %62, %v60
      %v64 = vpop.permute.xlu0 %63
      %65 = vset.pattern.permute.xlu0 0
      %66 = vperm.xlu0 %65, %v61
      %v67 = vpop.permute.xlu0 %66
      %vm68 = vcmp.lt.s32.totalorder %v57, %v64
      %vm69 = vcmp.lt.s32.totalorder %v58, %v64
      %vm70 = vcmp.lt.s32.totalorder %v57, %v67
      %vm71 = vcmp.lt.s32.totalorder %v58, %v67
      %v72 = vld [vmem:[#allocation5] sm:$0xff]
      %v73 = vld [vmem:[#allocation5 + $0x8] sm:$0xff]
      %v74 = vld [vmem:[#allocation5 + $0x10] sm:$0xff]
      %v75 = vld [vmem:[#allocation5 + $0x18] sm:$0xff]
      %v76 = vsel %vm68, %v72, 0.0
      %v77 = vsel %vm69, %v73, 0.0
      %v78 = vsel %vm70, %v74, 0.0
      %v79 = vsel %vm71, %v75, 0.0
      %v80 = vld [vmem:[#allocation2] sm:$0x3]
      %vm81 = vcmask 261120
      %v82 = vsel %vm81, %v76, 0.0
      %v83 = vsel %vm81, %v77, 0.0
      %v84 = vadd.f32 %v82, %v83
      %v85 = vrot.slane %v84, 4
      %v86 = vadd.f32 %v84, %v85
      %v87 = vrot.slane %v86, 2
      %v88 = vadd.f32 %v86, %v87
      %v89 = vrot.slane %v88, 1
      %v90 = vadd.f32 %v88, %v89
      %v91 = vsel %vm81, %v78, 0.0
      %v92 = vsel %vm81, %v79, 0.0
      %v93 = vadd.f32 %v91, %v92
      %v94 = vrot.slane %v93, 4
      %v95 = vadd.f32 %v93, %v94
      %v96 = vrot.slane %v95, 2
      %v97 = vadd.f32 %v95, %v96
      %v98 = vrot.slane %v97, 1
      %v99 = vadd.f32 %v97, %v98
      %vm102 = vcmask 1041409
      %v103 = vsel %vm102, %v99, %v90
      %v105 = vadd.f32 %v80, %v103
      %vm106 = vcmask 254976
      %107 = vst.msk [vmem:[#allocation2] sm:$0x3] %vm106, %v105
    $region21: #{tpu_custom_call.1} parent=1 // pred_fallthru
      _
    %p108 = scmp.eq.s32.totalorder 0, %s40
    // Predicated region
    $region22: #{tpu_custom_call.1} parent=1 // pred_check
      %p109 = pneg %p108
    $region23: #{tpu_custom_call.1} parent=1 // pred_check_branch
      %111 = sbr.rel (%p109) target = $region25
    $region24: #{tpu_custom_call.1} parent=1 // pred_region
      %v112 = vld [vmem:[%s1] sm:$0x3]
      %v113 = vcvt.s32.f32 %v112
      %v114 = vrcp.pop %v113
      %v115 = vmul.f32 %v113, %v114
      %v116 = vsub.f32 1.0, %v115
      %v117 = vmul.f32 %v114, %v116
      %v118 = vadd.f32 %v114, %v117
      %vm119 = vweird.f32 %v113
      %vm120 = vweird.f32 %v114
      %vm121 = vmor %vm119, %vm120
      %v122 = vsel %vm121, %v114, %v118
      %v123 = vand.u32 2147483647, %v113
      %vm124 = vcmp.eq.f32.partialorder %v123, 8.507059e+37
      %v125 = vand.u32 %v113, 2147483648
      %v126 = vor.u32 1.1754944e-38, %v125
      %v127 = vsel %vm124, %v126, %v122
      %v128 = vmul.f32 1.0, %v127
      %v129 = vld [vmem:[#allocation2] sm:$0x3]
      %131 = vset.pattern.permute.xlu0 0
      %132 = vperm.xlu0 %131, %v128
      %v133 = vpop.permute.xlu0 %132
      %v135 = vmul.f32 %v129, %v133
      %vm136 = vcmask 254976
      %137 = vst.msk [vmem:[#allocation8] sm:$0x3] %vm136, %v135
    $region25: #{tpu_custom_call.1} parent=1 // pred_fallthru
      _
    // Predicated region
    $region26: #{tpu_custom_call.1} parent=1 // pred_check
      _
    $region27: #{tpu_custom_call.1} parent=1 // pred_check_branch
      %139 = sbr.rel (0) target = $region29
    $region28: #{tpu_custom_call.1} parent=1 // pred_region
      %141 = vsyncadd [#allocation7], 0
      %s143 = sshll.u32 [#allocation8], 4
      %s144 = int_to_ptr.vmem [resolvable:$true] %s143
      %s145 = sshll.u32 %s3, 4
      %s146 = int_to_ptr.hbm [resolvable:$true] %s145
      %148 = dma.vmem_to_hbm [thread:$0]  %s144, 32, %s146, [#allocation7]
    $region29: #{tpu_custom_call.1} parent=1 // pred_fallthru
      _
    // Predicated region
    $region30: #{tpu_custom_call.1} parent=1 // pred_check
      _
    $region31: #{tpu_custom_call.1} parent=1 // pred_check_branch
      %150 = sbr.rel (0) target = $region33
    $region32: #{tpu_custom_call.1} parent=1 // pred_region
      %152 = dma.done [#allocation7], 32
    $region33: #{tpu_custom_call.1} parent=1 // pred_fallthru
      _
    %153 = vsyncpa [#allocation6], 1
    %154 = vsyncpa [#allocation7], 1

</llo_original>
